<compile_context>
chip_gen: v7x
topology: tpu7x:2x2x1
jax: 0.10.0
libtpu: 0.0.40
codegen_flags: <defaults>
</compile_context>

<pallas_src>
import jax
import jax.numpy as jnp
from jax.experimental import pallas as pl
from jax.experimental.pallas import tpu as pltpu


def _fanout_kernel(x_ref, w_ref, b_ref, *o_refs):
    # x_ref : (B, D)     shared input (fan-out: every branch reads the same x)
    # w_ref : (D, N*H)   branch weights concatenated along the lane dim
    # b_ref : (1, N*H)   branch biases concatenated along the lane dim
    # o_refs: N refs of (B, H) -- one per branch (FanOut's list of outputs)
    y = jnp.dot(x_ref[...], w_ref[...], preferred_element_type=jnp.float32)
    y = y + b_ref[...]
    h = o_refs[0].shape[-1]
    # Static Python loop (N is a compile-time constant) -> unrolled, full-lane
    # stores; each slice starts on a multiple of H (=128 in the demo), i.e. a
    # vreg lane boundary, so no cross-lane data movement is required.
    for n, o_ref in enumerate(o_refs):
        o_ref[...] = y[:, n * h:(n + 1) * h].astype(o_ref.dtype)


def fanout_linear(x, w_stack, b_stack):
    """Apply N linear branches to the same x with one fused Pallas kernel.

    x: [B, D], w_stack: [N, D, H], b_stack: [N, 1, H]  ->  list of N [B, H].
    """
    B, D = x.shape
    N, _, H = w_stack.shape

    # One-time layout plumbing: [N, D, H] -> [D, N*H], [N, 1, H] -> [1, N*H].
    # Column n*H + h of W_wide is column h of branch n's weight.
    w_wide = jnp.transpose(w_stack, (1, 0, 2)).reshape(D, N * H)
    b_wide = b_stack.reshape(1, N * H)

    outs = pl.pallas_call(
        _fanout_kernel,
        out_shape=tuple(
            jax.ShapeDtypeStruct((B, H), x.dtype) for _ in range(N)
        ),
        grid_spec=pltpu.PrefetchScalarGridSpec(
            num_scalar_prefetch=0,
            grid=(1,),  # single step: one wide matmul, no per-branch loop
            in_specs=[
                pl.BlockSpec((B, D), lambda i: (0, 0)),
                pl.BlockSpec((D, N * H), lambda i: (0, 0)),
                pl.BlockSpec((1, N * H), lambda i: (0, 0)),
            ],
            out_specs=tuple(
                pl.BlockSpec((B, H), lambda i: (0, 0)) for _ in range(N)
            ),
        ),
        compiler_params=pltpu.CompilerParams(
            dimension_semantics=("arbitrary",),
        ),
    )(x, w_wide, b_wide)

    # FanOut.forward returns a Python list: [module(x) for module in modules].
    return list(outs)


if __name__ == "__main__":
    # Deterministic synthetic parameters / inputs.  Shapes chosen small but
    # lane/sublane aligned: B=8 (one sublane tile), D=H=128 (one lane tile),
    # N=3 branches -> W_wide is [128, 384].
    B, D, H, N = 8, 128, 128, 3

    key = jax.random.PRNGKey(0)
    kx, kw, kb = jax.random.split(key, 3)

    x = jax.random.normal(kx, (B, D), dtype=jnp.float32)
    w_stack = jax.random.normal(kw, (N, D, H), dtype=jnp.float32) * 0.1
    b_stack = jax.random.normal(kb, (N, 1, H), dtype=jnp.float32) * 0.1

    outs = fanout_linear(x, w_stack, b_stack)
    outs = [jax.block_until_ready(o) for o in outs]

    # Reference: list comprehension over branches, like the PyTorch module.
    refs = [x @ w_stack[n] + b_stack[n, 0] for n in range(N)]
    for o, r in zip(outs, refs):
        assert o.shape == (B, H)
        assert jnp.allclose(o, r, atol=1e-4, rtol=1e-4)

    print("KERNEL_OK")
</pallas_src>

<mosaic_0001>
module attributes {stable_mosaic.version = 11 : i64} {
  func.func @_fanout_kernel(%arg0: i32, %arg1: memref<8x128xf32, #tpu.memory_space<vmem>>, %arg2: memref<128x384xf32, #tpu.memory_space<vmem>>, %arg3: memref<1x384xf32, #tpu.memory_space<vmem>>, %arg4: memref<8x128xf32, #tpu.memory_space<vmem>>, %arg5: memref<8x128xf32, #tpu.memory_space<vmem>>, %arg6: memref<8x128xf32, #tpu.memory_space<vmem>>) attributes {dimension_semantics = [#tpu.dimension_semantics<arbitrary>], iteration_bounds = array<i64: 1>, scalar_prefetch = 0 : i64, scratch_operands = 0 : i64, tpu.core_type = #tpu.core_type<tc>, window_params = [{pipeline_mode = #tpu.pipeline_mode<synchronous>, transform_indices = @transform_0, window_bounds = array<i64: 8, 128>}, {pipeline_mode = #tpu.pipeline_mode<synchronous>, transform_indices = @transform_1, window_bounds = array<i64: 128, 384>}, {pipeline_mode = #tpu.pipeline_mode<synchronous>, transform_indices = @transform_2, window_bounds = array<i64: 1, 384>}, {pipeline_mode = #tpu.pipeline_mode<synchronous>, transform_indices = @transform_3, window_bounds = array<i64: 8, 128>}, {pipeline_mode = #tpu.pipeline_mode<synchronous>, transform_indices = @transform_4, window_bounds = array<i64: 8, 128>}, {pipeline_mode = #tpu.pipeline_mode<synchronous>, transform_indices = @transform_5, window_bounds = array<i64: 8, 128>}]} {
    %c0 = arith.constant 0 : index
    %c0_0 = arith.constant 0 : index
    %0 = vector.load %arg1[%c0, %c0_0] : memref<8x128xf32, #tpu.memory_space<vmem>>, vector<8x128xf32>
    %c0_1 = arith.constant 0 : index
    %c0_2 = arith.constant 0 : index
    %1 = vector.load %arg2[%c0_1, %c0_2] : memref<128x384xf32, #tpu.memory_space<vmem>>, vector<128x384xf32>
    %cst = arith.constant dense<0.000000e+00> : vector<8x384xf32>
    %2 = tpu.matmul %0, %1, %cst {dimension_numbers = #tpu.dot_dimension_numbers<[1], [0], [0], [1], [0, 0, 1, 1], [], []>} : vector<8x128xf32>, vector<128x384xf32>, vector<8x384xf32> -> vector<8x384xf32>
    %c0_3 = arith.constant 0 : index
    %c0_4 = arith.constant 0 : index
    %3 = vector.load %arg3[%c0_3, %c0_4] : memref<1x384xf32, #tpu.memory_space<vmem>>, vector<1x384xf32>
    %4 = vector.broadcast %3 : vector<1x384xf32> to vector<8x384xf32>
    %5 = arith.addf %2, %4 : vector<8x384xf32>
    %6 = vector.extract_strided_slice %5 {offsets = [0, 0], sizes = [8, 128], strides = [1, 1]} : vector<8x384xf32> to vector<8x128xf32>
    %c0_5 = arith.constant 0 : index
    %c0_6 = arith.constant 0 : index
    %7 = vector.load %arg4[%c0_5, %c0_6] : memref<8x128xf32, #tpu.memory_space<vmem>>, vector<8x128xf32>
    tpu.vector_store %arg4[%c0_5, %c0_6], %6 {strides = array<i32>} : memref<8x128xf32, #tpu.memory_space<vmem>>, vector<8x128xf32>,
    %8 = vector.extract_strided_slice %5 {offsets = [0, 128], sizes = [8, 128], strides = [1, 1]} : vector<8x384xf32> to vector<8x128xf32>
    %c0_7 = arith.constant 0 : index
    %c0_8 = arith.constant 0 : index
    %9 = vector.load %arg5[%c0_7, %c0_8] : memref<8x128xf32, #tpu.memory_space<vmem>>, vector<8x128xf32>
    tpu.vector_store %arg5[%c0_7, %c0_8], %8 {strides = array<i32>} : memref<8x128xf32, #tpu.memory_space<vmem>>, vector<8x128xf32>,
    %10 = vector.extract_strided_slice %5 {offsets = [0, 256], sizes = [8, 128], strides = [1, 1]} : vector<8x384xf32> to vector<8x128xf32>
    %c0_9 = arith.constant 0 : index
    %c0_10 = arith.constant 0 : index
    %11 = vector.load %arg6[%c0_9, %c0_10] : memref<8x128xf32, #tpu.memory_space<vmem>>, vector<8x128xf32>
    tpu.vector_store %arg6[%c0_9, %c0_10], %10 {strides = array<i32>} : memref<8x128xf32, #tpu.memory_space<vmem>>, vector<8x128xf32>,
    return
  }
  func.func @transform_0(%arg0: i32) -> (i32, i32) {
    %c0_i32 = arith.constant 0 : i32
    %c0_i32_0 = arith.constant 0 : i32
    %c0_i32_1 = arith.constant 0 : i32
    return %c0_i32, %c0_i32_0 : i32, i32
  }
  func.func @transform_1(%arg0: i32) -> (i32, i32) {
    %c0_i32 = arith.constant 0 : i32
    %c0_i32_0 = arith.constant 0 : i32
    %c0_i32_1 = arith.constant 0 : i32
    return %c0_i32, %c0_i32_0 : i32, i32
  }
  func.func @transform_2(%arg0: i32) -> (i32, i32) {
    %c0_i32 = arith.constant 0 : i32
    %c0_i32_0 = arith.constant 0 : i32
    %c0_i32_1 = arith.constant 0 : i32
    return %c0_i32, %c0_i32_0 : i32, i32
  }
  func.func @transform_3(%arg0: i32) -> (i32, i32) {
    %c0_i32 = arith.constant 0 : i32
    %c0_i32_0 = arith.constant 0 : i32
    %c0_i32_1 = arith.constant 0 : i32
    return %c0_i32, %c0_i32_0 : i32, i32
  }
  func.func @transform_4(%arg0: i32) -> (i32, i32) {
    %c0_i32 = arith.constant 0 : i32
    %c0_i32_0 = arith.constant 0 : i32
    %c0_i32_1 = arith.constant 0 : i32
    return %c0_i32, %c0_i32_0 : i32, i32
  }
  func.func @transform_5(%arg0: i32) -> (i32, i32) {
    %c0_i32 = arith.constant 0 : i32
    %c0_i32_0 = arith.constant 0 : i32
    %c0_i32_1 = arith.constant 0 : i32
    return %c0_i32, %c0_i32_0 : i32, i32
  }
}

</mosaic_0001>

<llo_original>
// kernel: tpu_custom_call.1
$region0: #{tpu_custom_call.1}
  #allocation0 [shape = 'u32[]', space=smem, size = 0x4, offset = 0x4, fixed_abs, tag = 'smem constant byte address 0x4 - core index']
  #allocation1 [shape = 'u32[144,128]{1,0:T(1,128)}', space=vmem, size = 0x12000, scoped, tag = 'internal scratch']
  %s0 = inlined_call_operand.hbm [shape: f32[8,128], index: 0, kind: input, shape index: {}]
  %s1 = inlined_call_operand.hbm [shape: f32[128,384], index: 1, kind: input, shape index: {}]
  %s2 = inlined_call_operand.vmem [shape: f32[1,384], index: 2, kind: input, shape index: {}]
  %s3 = inlined_call_operand.hbm [shape: f32[8,128], index: 3, kind: output, shape index: {0}]
  %s4 = inlined_call_operand.hbm [shape: f32[8,128], index: 4, kind: output, shape index: {1}]
  %s5 = inlined_call_operand.hbm [shape: f32[8,128], index: 5, kind: output, shape index: {2}]
  %6 = xla_tuple %s3, %s4, %s5
  %s7 = sld [smem:[#allocation0]]
  $region46: #{tpu_custom_call.1} parent=0
    _
  %s9 = ssub.s32 1, %s7
  %s10 = scalar_select 0, %s9, %s7
  $region1: #{tpu_custom_call.1} parent=0
    #allocation2 [shape = 'u8[4096]{0}', space=vmem, size = 0x1000, scoped, tag = 'input window, operand 0, single buffered']
    #allocation3 [shape = 's32[1]{0}', space=sflag, size = 0x4, scoped, tag = 'scoped memory for tpu_custom_call.1']
    #allocation4 [shape = 's32[1]{0}', space=sflag, size = 0x4, scoped, tag = 'scoped memory for tpu_custom_call.1']
    #allocation5 [shape = 'u8[196608]{0}', space=vmem, size = 0x30000, scoped, tag = 'input window, operand 1, single buffered']
    #allocation6 [shape = 's32[1]{0}', space=sflag, size = 0x4, scoped, tag = 'scoped memory for tpu_custom_call.1']
    #allocation7 [shape = 'u8[4096]{0}', space=vmem, size = 0x1000, scoped, tag = 'output window, operand 0, single buffered']
    #allocation8 [shape = 'u8[4096]{0}', space=vmem, size = 0x1000, scoped, tag = 'output window, operand 1, single buffered']
    #allocation9 [shape = 's32[1]{0}', space=sflag, size = 0x4, scoped, tag = 'scoped memory for tpu_custom_call.1']
    #allocation10 [shape = 'u8[4096]{0}', space=vmem, size = 0x1000, scoped, tag = 'output window, operand 2, single buffered']
    %11 = vsyncpa [#allocation3], 0
    %12 = vsyncpa [#allocation6], 0
    %13 = vsyncpa [#allocation4], 0
    %14 = vsyncpa [#allocation9], 0
    // Predicated region
    $region2: #{tpu_custom_call.1} parent=1 // pred_check
      _
    $region3: #{tpu_custom_call.1} parent=1 // pred_check_branch
      %16 = sbr.rel (0) target = $region5
    $region4: #{tpu_custom_call.1} parent=1 // pred_region
      %s18 = ssub.s32 128, 128
      %19 = vsyncadd [#allocation3], %s18
      %s21 = sshll.u32 [#allocation2], 4
      %s22 = int_to_ptr.vmem [resolvable:$true] %s21
      %24 = dma.hbm_to_vmem [thread:$0]  %s0, 128, %s22, [#allocation3]
    $region5: #{tpu_custom_call.1} parent=1 // pred_fallthru
      _
    // Predicated region
    $region6: #{tpu_custom_call.1} parent=1 // pred_check
      _
    $region7: #{tpu_custom_call.1} parent=1 // pred_check_branch
      %26 = sbr.rel (0) target = $region9
    $region8: #{tpu_custom_call.1} parent=1 // pred_region
      %s28 = ssub.s32 6144, 6144
      %29 = vsyncadd [#allocation6], %s28
      %s30 = sshll.u32 [#allocation5], 4
      %s31 = int_to_ptr.vmem [resolvable:$true] %s30
      %36 = dma.hbm_to_vmem [thread:$0]  %s1, 6144, %s31, [#allocation6], 384, 384, 24
    $region9: #{tpu_custom_call.1} parent=1 // pred_fallthru
      _
    // Predicated region
    $region10: #{tpu_custom_call.1} parent=1 // pred_check
      _
    $region11: #{tpu_custom_call.1} parent=1 // pred_check_branch
      %38 = sbr.rel (0) target = $region13
    $region12: #{tpu_custom_call.1} parent=1 // pred_region
      _
    $region13: #{tpu_custom_call.1} parent=1 // pred_fallthru
      _
    // Predicated region
    $region14: #{tpu_custom_call.1} parent=1 // pred_check
      _
    $region15: #{tpu_custom_call.1} parent=1 // pred_check_branch
      %40 = sbr.rel (0) target = $region17
    $region16: #{tpu_custom_call.1} parent=1 // pred_region
      %41 = dma.done [#allocation3], 128
    $region17: #{tpu_custom_call.1} parent=1 // pred_fallthru
      _
    // Predicated region
    $region18: #{tpu_custom_call.1} parent=1 // pred_check
      _
    $region19: #{tpu_custom_call.1} parent=1 // pred_check_branch
      %43 = sbr.rel (0) target = $region21
    $region20: #{tpu_custom_call.1} parent=1 // pred_region
      %44 = dma.done [#allocation6], 6144
    $region21: #{tpu_custom_call.1} parent=1 // pred_fallthru
      _
    %v45 = vld [vmem:[#allocation2] sm:$0xff]
    %v46 = vld [vmem:[#allocation5] sm:$0xff]
    %v47 = vld [vmem:[#allocation5 + $0x8] sm:$0xff]
    %v48 = vld [vmem:[#allocation5 + $0x10] sm:$0xff]
    %v49 = vld [vmem:[#allocation5 + $0x18] sm:$0xff]
    %v50 = vld [vmem:[#allocation5 + $0x20] sm:$0xff]
    %v51 = vld [vmem:[#allocation5 + $0x28] sm:$0xff]
    %v52 = vld [vmem:[#allocation5 + $0x30] sm:$0xff]
    %v53 = vld [vmem:[#allocation5 + $0x38] sm:$0xff]
    %v54 = vld [vmem:[#allocation5 + $0x40] sm:$0xff]
    %v55 = vld [vmem:[#allocation5 + $0x48] sm:$0xff]
    %v56 = vld [vmem:[#allocation5 + $0x50] sm:$0xff]
    %v57 = vld [vmem:[#allocation5 + $0x58] sm:$0xff]
    %v58 = vld [vmem:[#allocation5 + $0x60] sm:$0xff]
    %v59 = vld [vmem:[#allocation5 + $0x68] sm:$0xff]
    %v60 = vld [vmem:[#allocation5 + $0x70] sm:$0xff]
    %v61 = vld [vmem:[#allocation5 + $0x78] sm:$0xff]
    %v62 = vld [vmem:[#allocation5 + $0x80] sm:$0xff]
    %v63 = vld [vmem:[#allocation5 + $0x88] sm:$0xff]
    %v64 = vld [vmem:[#allocation5 + $0x90] sm:$0xff]
    %v65 = vld [vmem:[#allocation5 + $0x98] sm:$0xff]
    %v66 = vld [vmem:[#allocation5 + $0xa0] sm:$0xff]
    %v67 = vld [vmem:[#allocation5 + $0xa8] sm:$0xff]
    %v68 = vld [vmem:[#allocation5 + $0xb0] sm:$0xff]
    %v69 = vld [vmem:[#allocation5 + $0xb8] sm:$0xff]
    %v70 = vld [vmem:[#allocation5 + $0xc0] sm:$0xff]
    %v71 = vld [vmem:[#allocation5 + $0xc8] sm:$0xff]
    %v72 = vld [vmem:[#allocation5 + $0xd0] sm:$0xff]
    %v73 = vld [vmem:[#allocation5 + $0xd8] sm:$0xff]
    %v74 = vld [vmem:[#allocation5 + $0xe0] sm:$0xff]
    %v75 = vld [vmem:[#allocation5 + $0xe8] sm:$0xff]
    %v76 = vld [vmem:[#allocation5 + $0xf0] sm:$0xff]
    %v77 = vld [vmem:[#allocation5 + $0xf8] sm:$0xff]
    %v78 = vld [vmem:[#allocation5 + $0x100] sm:$0xff]
    %v79 = vld [vmem:[#allocation5 + $0x108] sm:$0xff]
    %v80 = vld [vmem:[#allocation5 + $0x110] sm:$0xff]
    %v81 = vld [vmem:[#allocation5 + $0x118] sm:$0xff]
    %v82 = vld [vmem:[#allocation5 + $0x120] sm:$0xff]
    %v83 = vld [vmem:[#allocation5 + $0x128] sm:$0xff]
    %v84 = vld [vmem:[#allocation5 + $0x130] sm:$0xff]
    %v85 = vld [vmem:[#allocation5 + $0x138] sm:$0xff]
    %v86 = vld [vmem:[#allocation5 + $0x140] sm:$0xff]
    %v87 = vld [vmem:[#allocation5 + $0x148] sm:$0xff]
    %v88 = vld [vmem:[#allocation5 + $0x150] sm:$0xff]
    %v89 = vld [vmem:[#allocation5 + $0x158] sm:$0xff]
    %v90 = vld [vmem:[#allocation5 + $0x160] sm:$0xff]
    %v91 = vld [vmem:[#allocation5 + $0x168] sm:$0xff]
    %v92 = vld [vmem:[#allocation5 + $0x170] sm:$0xff]
    %v93 = vld [vmem:[#allocation5 + $0x178] sm:$0xff]
    %v94 = vld [vmem:[%s2] sm:$0x7]
    %v96 = vlaneseq
    %v97 = vshrl.u32 %v96, 7
    %v98 = vsub.s32 0, %v97
    %v99 = vrot.slane %v94, %v98
    %v100 = vlaneseq
    %v101 = vshrl.u32 %v100, 7
    %v102 = vsub.s32 1, %v101
    %v103 = vrot.slane %v94, %v102
    %v104 = vlaneseq
    %v105 = vshrl.u32 %v104, 7
    %v106 = vsub.s32 2, %v105
    %v107 = vrot.slane %v94, %v106
    %111 = vmatprep.subr.mxu0 %v47
    %112 = vmatpush1.msra.mxu0 %v46
    %113 = vmatprep.subr.mxu0 %v50
    %114 = vmatpush1.msra.mxu0 %v49
    %115 = vmatprep.subr.mxu0 %v53
    %116 = vmatpush1.msra.mxu0 %v52
    %117 = vmatprep.subr.mxu0 %v56
    %118 = vmatpush1.msra.mxu0 %v55
    %119 = vmatprep.subr.mxu0 %v59
    %120 = vmatpush1.msra.mxu0 %v58
    %121 = vmatprep.subr.mxu0 %v62
    %122 = vmatpush1.msra.mxu0 %v61
    %123 = vmatprep.subr.mxu0 %v65
    %124 = vmatpush1.msra.mxu0 %v64
    %125 = vmatprep.subr.mxu0 %v68
    %126 = vmatpush1.msra.mxu0 %v67
    %127 = vmatprep.subr.mxu0 %v71
    %128 = vmatpush1.msra.mxu0 %v70
    %129 = vmatprep.subr.mxu0 %v74
    %130 = vmatpush1.msra.mxu0 %v73
    %131 = vmatprep.subr.mxu0 %v77
    %132 = vmatpush1.msra.mxu0 %v76
    %133 = vmatprep.subr.mxu0 %v80
    %134 = vmatpush1.msra.mxu0 %v79
    %135 = vmatprep.subr.mxu0 %v83
    %136 = vmatpush1.msra.mxu0 %v82
    %137 = vmatprep.subr.mxu0 %v86
    %138 = vmatpush1.msra.mxu0 %v85
    %139 = vmatprep.subr.mxu0 %v89
    %140 = vmatpush1.msra.mxu0 %v88
    %141 = vmatprep.subr.mxu0 %v92
    %142 = vmatpush1.msra.mxu0 %v91
    %143 = vmatprep.subr.mxu0 0.0
    %144 = vmatpush1.msra.mxu0 0.0
    %145 = vmatprep.subr.mxu0 0.0
    %146 = vmatpush1.msra.mxu0 0.0
    %147 = vmatprep.subr.mxu0 0.0
    %148 = vmatpush1.msra.mxu0 0.0
    %149 = vmatprep.subr.mxu0 0.0
    %150 = vmatpush1.msra.mxu0 0.0
    %151 = vmatprep.subr.mxu0 0.0
    %152 = vmatpush1.msra.mxu0 0.0
    %153 = vmatprep.subr.mxu0 0.0
    %154 = vmatpush1.msra.mxu0 0.0
    %155 = vmatprep.subr.mxu0 0.0
    %156 = vmatpush1.msra.mxu0 0.0
    %157 = vmatprep.subr.mxu0 0.0
    %158 = vmatpush1.msra.mxu0 0.0
    %159 = vmatprep.subr.mxu0 0.0
    %160 = vmatpush1.msra.mxu0 0.0
    %161 = vmatprep.subr.mxu0 0.0
    %162 = vmatpush1.msra.mxu0 0.0
    %163 = vmatprep.subr.mxu0 0.0
    %164 = vmatpush1.msra.mxu0 0.0
    %165 = vmatprep.subr.mxu0 0.0
    %166 = vmatpush1.msra.mxu0 0.0
    %167 = vmatprep.subr.mxu0 0.0
    %168 = vmatpush1.msra.mxu0 0.0
    %169 = vmatprep.subr.mxu0 0.0
    %170 = vmatpush1.msra.mxu0 0.0
    %171 = vmatprep.subr.mxu0 0.0
    %172 = vmatpush1.msra.mxu0 0.0
    %173 = vmatprep.subr.mxu0 0.0
    %174 = vmatpush1.msra.mxu0 0.0
    %175 = vmatprep.mubr.f32.mxu0 0.0
    %176 = vmatmul.mubr.f32.gmra.mrb[0].mxu0 %v45
    %v177 = vpop.f32.mrb[0].mxu0
    %v178 = vadd.f32 %v99, %v177
    %v179 = vpop.f32.mrb[0].mxu0
    %v180 = vadd.f32 %v103, %v179
    %181 = vdwg.mxu0
    %182 = vmatprep.subr.mxu0 0.0
    %183 = vmatpush1.msra.mxu0 %v48
    %184 = vmatprep.subr.mxu0 0.0
    %185 = vmatpush1.msra.mxu0 %v51
    %186 = vmatprep.subr.mxu0 0.0
    %187 = vmatpush1.msra.mxu0 %v54
    %188 = vmatprep.subr.mxu0 0.0
    %189 = vmatpush1.msra.mxu0 %v57
    %190 = vmatprep.subr.mxu0 0.0
    %191 = vmatpush1.msra.mxu0 %v60
    %192 = vmatprep.subr.mxu0 0.0
    %193 = vmatpush1.msra.mxu0 %v63
    %194 = vmatprep.subr.mxu0 0.0
    %195 = vmatpush1.msra.mxu0 %v66
    %196 = vmatprep.subr.mxu0 0.0
    %197 = vmatpush1.msra.mxu0 %v69
    %198 = vmatprep.subr.mxu0 0.0
    %199 = vmatpush1.msra.mxu0 %v72
    %200 = vmatprep.subr.mxu0 0.0
    %201 = vmatpush1.msra.mxu0 %v75
    %202 = vmatprep.subr.mxu0 0.0
    %203 = vmatpush1.msra.mxu0 %v78
    %204 = vmatprep.subr.mxu0 0.0
    %205 = vmatpush1.msra.mxu0 %v81
    %206 = vmatprep.subr.mxu0 0.0
    %207 = vmatpush1.msra.mxu0 %v84
    %208 = vmatprep.subr.mxu0 0.0
    %209 = vmatpush1.msra.mxu0 %v87
    %210 = vmatprep.subr.mxu0 0.0
    %211 = vmatpush1.msra.mxu0 %v90
    %212 = vmatprep.subr.mxu0 0.0
    %213 = vmatpush1.msra.mxu0 %v93
    %214 = vmatprep.subr.mxu0 0.0
    %215 = vmatpush1.msra.mxu0 0.0
    %216 = vmatprep.subr.mxu0 0.0
    %217 = vmatpush1.msra.mxu0 0.0
    %218 = vmatprep.subr.mxu0 0.0
    %219 = vmatpush1.msra.mxu0 0.0
    %220 = vmatprep.subr.mxu0 0.0
    %221 = vmatpush1.msra.mxu0 0.0
    %222 = vmatprep.subr.mxu0 0.0
    %223 = vmatpush1.msra.mxu0 0.0
    %224 = vmatprep.subr.mxu0 0.0
    %225 = vmatpush1.msra.mxu0 0.0
    %226 = vmatprep.subr.mxu0 0.0
    %227 = vmatpush1.msra.mxu0 0.0
    %228 = vmatprep.subr.mxu0 0.0
    %229 = vmatpush1.msra.mxu0 0.0
    %230 = vmatprep.subr.mxu0 0.0
    %231 = vmatpush1.msra.mxu0 0.0
    %232 = vmatprep.subr.mxu0 0.0
    %233 = vmatpush1.msra.mxu0 0.0
    %234 = vmatprep.subr.mxu0 0.0
    %235 = vmatpush1.msra.mxu0 0.0
    %236 = vmatprep.subr.mxu0 0.0
    %237 = vmatpush1.msra.mxu0 0.0
    %238 = vmatprep.subr.mxu0 0.0
    %239 = vmatpush1.msra.mxu0 0.0
    %240 = vmatprep.subr.mxu0 0.0
    %241 = vmatpush1.msra.mxu0 0.0
    %242 = vmatprep.subr.mxu0 0.0
    %243 = vmatpush1.msra.mxu0 0.0
    %244 = vmatprep.subr.mxu0 0.0
    %245 = vmatpush1.msra.mxu0 0.0
    %246 = vmatprep.mubr.f32.mxu0 0.0
    %247 = vmatmul.mubr.f32.gmra.mrb[0].mxu0 %v45
    %v248 = vpop.f32.mrb[0].mxu0
    %v249 = vadd.f32 %v107, %v248
    %v250 = vpop.f32.mrb[0].mxu0
    %251 = vdwg.mxu0
    %252 = vst [vmem:[#allocation7] sm:$0xff] %v178
    %253 = vst [vmem:[#allocation8] sm:$0xff] %v180
    %254 = vst [vmem:[#allocation10] sm:$0xff] %v249
    // Predicated region
    $region22: #{tpu_custom_call.1} parent=1 // pred_check
      _
    $region23: #{tpu_custom_call.1} parent=1 // pred_check_branch
      %256 = sbr.rel (0) target = $region25
    $region24: #{tpu_custom_call.1} parent=1 // pred_region
      %s258 = ssub.s32 128, 128
      %259 = vsyncadd [#allocation4], %s258
      %s261 = sshll.u32 [#allocation7], 4
      %s262 = int_to_ptr.vmem [resolvable:$true] %s261
      %264 = dma.vmem_to_hbm [thread:$0]  %s262, 128, %s3, [#allocation4]
    $region25: #{tpu_custom_call.1} parent=1 // pred_fallthru
      _
    // Predicated region
    $region26: #{tpu_custom_call.1} parent=1 // pred_check
      _
    $region27: #{tpu_custom_call.1} parent=1 // pred_check_branch
      %266 = sbr.rel (0) target = $region29
    $region28: #{tpu_custom_call.1} parent=1 // pred_region
      %s268 = ssub.s32 128, 128
      %269 = vsyncadd [#allocation9], %s268
      %s271 = sshll.u32 [#allocation8], 4
      %s272 = int_to_ptr.vmem [resolvable:$true] %s271
      %274 = dma.vmem_to_hbm [thread:$0]  %s272, 128, %s4, [#allocation9]
    $region29: #{tpu_custom_call.1} parent=1 // pred_fallthru
      _
    // Predicated region
    $region30: #{tpu_custom_call.1} parent=1 // pred_check
      _
    $region31: #{tpu_custom_call.1} parent=1 // pred_check_branch
      %276 = sbr.rel (0) target = $region33
    $region32: #{tpu_custom_call.1} parent=1 // pred_region
      %s278 = ssub.s32 128, 128
      %279 = vsyncadd [#allocation9], %s278
      %s281 = sshll.u32 [#allocation10], 4
      %s282 = int_to_ptr.vmem [resolvable:$true] %s281
      %284 = dma.vmem_to_hbm [thread:$0]  %s282, 128, %s5, [#allocation9]
    $region33: #{tpu_custom_call.1} parent=1 // pred_fallthru
      _
    // Predicated region
    $region34: #{tpu_custom_call.1} parent=1 // pred_check
      _
    $region35: #{tpu_custom_call.1} parent=1 // pred_check_branch
      %286 = sbr.rel (0) target = $region37
    $region36: #{tpu_custom_call.1} parent=1 // pred_region
      %287 = dma.done [#allocation4], 128
    $region37: #{tpu_custom_call.1} parent=1 // pred_fallthru
      _
    // Predicated region
    $region38: #{tpu_custom_call.1} parent=1 // pred_check
      _
    $region39: #{tpu_custom_call.1} parent=1 // pred_check_branch
      %289 = sbr.rel (0) target = $region41
    $region40: #{tpu_custom_call.1} parent=1 // pred_region
      %290 = dma.done [#allocation9], 128
    $region41: #{tpu_custom_call.1} parent=1 // pred_fallthru
      _
    // Predicated region
    $region42: #{tpu_custom_call.1} parent=1 // pred_check
      _
    $region43: #{tpu_custom_call.1} parent=1 // pred_check_branch
      %292 = sbr.rel (0) target = $region45
    $region44: #{tpu_custom_call.1} parent=1 // pred_region
      %293 = dma.done [#allocation9], 128
    $region45: #{tpu_custom_call.1} parent=1 // pred_fallthru
      _
    %294 = vsyncpa [#allocation3], 1
    %295 = vsyncpa [#allocation6], 1
    %296 = vsyncpa [#allocation4], 1
    %297 = vsyncpa [#allocation9], 1

</llo_original>
